<compile_context>
chip_gen: v5e
topology: v5e:2x2
jax: 0.10.0
libtpu: 0.0.40
codegen_flags: <defaults>
</compile_context>

<pallas_src>
import functools

import jax
import jax.numpy as jnp
from jax.experimental import pallas as pl
from jax.experimental.pallas import tpu as pltpu

INPUT_DIM = 784
ENCODING_DIM = 32
SUBLANE = 8


def _round_up(x, m):
    return (x + m - 1) // m * m


def _autoencoder_kernel(x_ref, w_enc_ref, b_enc_ref, w_dec_ref, b_dec_ref,
                        dec_ref, enc_ref):
    # x_ref:      (TB, D)  f32 batch tile (edge tile masked by Pallas)
    # w_enc_ref:  (D, E)   encoder weight, pre-transposed, VMEM-resident
    # b_enc_ref:  (1, E)
    # w_dec_ref:  (E, D)   decoder weight, pre-transposed, VMEM-resident
    # b_dec_ref:  (1, D)
    x = x_ref[...]

    # Encoder: Linear + ReLU (MXU matmul + VPU elementwise, f32 throughout).
    pre_enc = jnp.dot(x, w_enc_ref[...], preferred_element_type=jnp.float32)
    encoded = jnp.maximum(pre_enc + b_enc_ref[...], 0.0)

    # Decoder: Linear (no activation).
    decoded = jnp.dot(encoded, w_dec_ref[...],
                      preferred_element_type=jnp.float32)
    decoded = decoded + b_dec_ref[...]

    dec_ref[...] = decoded.astype(dec_ref.dtype)
    enc_ref[...] = encoded.astype(enc_ref.dtype)


def prepare_params(w_enc, b_enc, w_dec, b_dec):
    """One-time preprocessing, hoisted out of the per-call path.

    Takes PyTorch-layout parameters (w_enc (E, D), b_enc (E,), w_dec (D, E),
    b_dec (D,)) and returns the pre-transposed / reshaped arrays the kernel
    consumes, so the hot path issues no extra XLA ops."""
    w_enc_t = jnp.asarray(w_enc, jnp.float32).T                 # (D, E)
    w_dec_t = jnp.asarray(w_dec, jnp.float32).T                 # (E, D)
    b_enc_2d = jnp.asarray(b_enc, jnp.float32).reshape(1, -1)   # (1, E)
    b_dec_2d = jnp.asarray(b_dec, jnp.float32).reshape(1, -1)   # (1, D)
    return w_enc_t, b_enc_2d, w_dec_t, b_dec_2d


@functools.partial(jax.jit, static_argnames=("batch_tile",))
def autoencoder_forward(x, w_enc_t, b_enc_2d, w_dec_t, b_dec_2d, *,
                        batch_tile=1024):
    """x: (B, 784) f32.  Other args come from prepare_params()."""
    B, D = x.shape
    E = w_enc_t.shape[1]

    # Batch tile: multiple of 8.  Fat tiles amortize the ~0.35us per-step
    # overhead; for small B shrink to the batch.  If the whole batch fits in
    # one tile but is big enough, split into two tiles so both v7x
    # TensorCores get work under dimension_semantics=("parallel",).
    TB = min(_round_up(batch_tile, SUBLANE), _round_up(B, SUBLANE))
    if pl.cdiv(B, TB) < 2 and B >= 2 * SUBLANE:
        TB = _round_up(pl.cdiv(B, 2), SUBLANE)
    num_tiles = pl.cdiv(B, TB)

    # VMEM budget: double-buffered x / decoded / encoded tiles + resident
    # weights + headroom.  Floor at the 16 MiB v5e scoped default (never go
    # below it), cap at v7x's 64 MiB physical VMEM per TensorCore.
    per_tile_bytes = TB * D * 4 * 2 + TB * E * 4
    weight_bytes = 2 * D * E * 4 + (D + E) * 4
    vmem_limit = int(min(max(2 * per_tile_bytes + 2 * weight_bytes + (4 << 20),
                             16 << 20),
                         64 << 20))

    cost = pl.CostEstimate(
        flops=4 * B * D * E,                                  # two matmuls
        transcendentals=0,
        bytes_accessed=4 * (2 * B * D + B * E + 2 * D * E + D + E),
    )

    decoded, encoded = pl.pallas_call(
        _autoencoder_kernel,
        out_shape=(
            jax.ShapeDtypeStruct((B, D), jnp.float32),   # decoded, no padding
            jax.ShapeDtypeStruct((B, E), jnp.float32),   # encoded, no padding
        ),
        grid=(num_tiles,),
        in_specs=[
            pl.BlockSpec((TB, D), lambda i: (i, 0)),   # x tile (streamed)
            pl.BlockSpec((D, E), lambda i: (0, 0)),    # w_enc^T (resident)
            pl.BlockSpec((1, E), lambda i: (0, 0)),    # b_enc   (resident)
            pl.BlockSpec((E, D), lambda i: (0, 0)),    # w_dec^T (resident)
            pl.BlockSpec((1, D), lambda i: (0, 0)),    # b_dec   (resident)
        ],
        out_specs=[
            pl.BlockSpec((TB, D), lambda i: (i, 0)),   # decoded tile
            pl.BlockSpec((TB, E), lambda i: (i, 0)),   # encoded tile
        ],
        compiler_params=pltpu.CompilerParams(
            dimension_semantics=("parallel",),
            vmem_limit_bytes=vmem_limit),
        cost_estimate=cost,
    )(x.astype(jnp.float32), w_enc_t, b_enc_2d, w_dec_t, b_dec_2d)

    return decoded, encoded


def init_params(key, input_dim=INPUT_DIM, encoding_dim=ENCODING_DIM):
    """Deterministic init mimicking nn.Linear's U(-1/sqrt(fan_in), 1/sqrt(fan_in))."""
    k1, k2, k3, k4 = jax.random.split(key, 4)
    lim_enc = 1.0 / jnp.sqrt(jnp.float32(input_dim))
    lim_dec = 1.0 / jnp.sqrt(jnp.float32(encoding_dim))
    w_enc = jax.random.uniform(k1, (encoding_dim, input_dim), jnp.float32,
                               -lim_enc, lim_enc)
    b_enc = jax.random.uniform(k2, (encoding_dim,), jnp.float32,
                               -lim_enc, lim_enc)
    w_dec = jax.random.uniform(k3, (input_dim, encoding_dim), jnp.float32,
                               -lim_dec, lim_dec)
    b_dec = jax.random.uniform(k4, (input_dim,), jnp.float32,
                               -lim_dec, lim_dec)
    return w_enc, b_enc, w_dec, b_dec


if __name__ == "__main__":
    key = jax.random.PRNGKey(0)
    k_x, k_p = jax.random.split(key)

    batch = 8
    x = jax.random.uniform(k_x, (batch, INPUT_DIM), jnp.float32)  # MNIST-like [0,1)
    w_enc, b_enc, w_dec, b_dec = init_params(k_p)

    # One-time parameter preprocessing (hoisted out of the hot path).
    params = prepare_params(w_enc, b_enc, w_dec, b_dec)

    decoded, encoded = autoencoder_forward(x, *params)
    jax.block_until_ready((decoded, encoded))

    # Reference check against plain JAX (same math as the PyTorch forward).
    enc_ref = jnp.maximum(x @ w_enc.T + b_enc, 0.0)
    dec_ref = enc_ref @ w_dec.T + b_dec
    assert decoded.shape == (batch, INPUT_DIM)
    assert encoded.shape == (batch, ENCODING_DIM)
    assert jnp.allclose(encoded, enc_ref, atol=1e-4, rtol=1e-4)
    assert jnp.allclose(decoded, dec_ref, atol=1e-4, rtol=1e-4)

    print("KERNEL_OK")
</pallas_src>

<mosaic_0001>
module attributes {stable_mosaic.version = 11 : i64} {
  func.func @_autoencoder_kernel(%arg0: i32, %arg1: memref<8x784xf32, #tpu.memory_space<vmem>>, %arg2: memref<784x32xf32, #tpu.memory_space<vmem>>, %arg3: memref<1x32xf32, #tpu.memory_space<vmem>>, %arg4: memref<32x784xf32, #tpu.memory_space<vmem>>, %arg5: memref<1x784xf32, #tpu.memory_space<vmem>>, %arg6: memref<8x784xf32, #tpu.memory_space<vmem>>, %arg7: memref<8x32xf32, #tpu.memory_space<vmem>>) attributes {dimension_semantics = [#tpu.dimension_semantics<parallel>], iteration_bounds = array<i64: 1>, scalar_prefetch = 0 : i64, scratch_operands = 0 : i64, tpu.core_type = #tpu.core_type<tc>, window_params = [{transform_indices = @transform_0, window_bounds = array<i64: 8, 784>}, {pipeline_mode = #tpu.pipeline_mode<synchronous>, transform_indices = @transform_1, window_bounds = array<i64: 784, 32>}, {pipeline_mode = #tpu.pipeline_mode<synchronous>, transform_indices = @transform_2, window_bounds = array<i64: 1, 32>}, {pipeline_mode = #tpu.pipeline_mode<synchronous>, transform_indices = @transform_3, window_bounds = array<i64: 32, 784>}, {pipeline_mode = #tpu.pipeline_mode<synchronous>, transform_indices = @transform_4, window_bounds = array<i64: 1, 784>}, {transform_indices = @transform_5, window_bounds = array<i64: 8, 784>}, {transform_indices = @transform_6, window_bounds = array<i64: 8, 32>}]} {
    %c0 = arith.constant 0 : index
    %c0_0 = arith.constant 0 : index
    %0 = vector.load %arg1[%c0, %c0_0] : memref<8x784xf32, #tpu.memory_space<vmem>>, vector<8x784xf32>
    %c0_1 = arith.constant 0 : index
    %c0_2 = arith.constant 0 : index
    %1 = vector.load %arg2[%c0_1, %c0_2] : memref<784x32xf32, #tpu.memory_space<vmem>>, vector<784x32xf32>
    %cst = arith.constant dense<0.000000e+00> : vector<8x32xf32>
    %2 = tpu.matmul %0, %1, %cst {dimension_numbers = #tpu.dot_dimension_numbers<[1], [0], [0], [1], [0, 0, 1, 1], [], []>} : vector<8x784xf32>, vector<784x32xf32>, vector<8x32xf32> -> vector<8x32xf32>
    %c0_3 = arith.constant 0 : index
    %c0_4 = arith.constant 0 : index
    %3 = vector.load %arg3[%c0_3, %c0_4] : memref<1x32xf32, #tpu.memory_space<vmem>>, vector<1x32xf32>
    %4 = vector.broadcast %3 : vector<1x32xf32> to vector<8x32xf32>
    %5 = arith.addf %2, %4 : vector<8x32xf32>
    %cst_5 = arith.constant 0.000000e+00 : f32
    %6 = vector.broadcast %cst_5 : f32 to vector<8x32xf32>
    %7 = arith.maximumf %5, %6 : vector<8x32xf32>
    %c0_6 = arith.constant 0 : index
    %c0_7 = arith.constant 0 : index
    %8 = vector.load %arg4[%c0_6, %c0_7] : memref<32x784xf32, #tpu.memory_space<vmem>>, vector<32x784xf32>
    %cst_8 = arith.constant dense<0.000000e+00> : vector<8x784xf32>
    %9 = tpu.matmul %7, %8, %cst_8 {dimension_numbers = #tpu.dot_dimension_numbers<[1], [0], [0], [1], [0, 0, 1, 1], [], []>} : vector<8x32xf32>, vector<32x784xf32>, vector<8x784xf32> -> vector<8x784xf32>
    %c0_9 = arith.constant 0 : index
    %c0_10 = arith.constant 0 : index
    %10 = vector.load %arg5[%c0_9, %c0_10] : memref<1x784xf32, #tpu.memory_space<vmem>>, vector<1x784xf32>
    %11 = vector.broadcast %10 : vector<1x784xf32> to vector<8x784xf32>
    %12 = arith.addf %9, %11 : vector<8x784xf32>
    %c0_11 = arith.constant 0 : index
    %c0_12 = arith.constant 0 : index
    %13 = vector.load %arg6[%c0_11, %c0_12] : memref<8x784xf32, #tpu.memory_space<vmem>>, vector<8x784xf32>
    tpu.vector_store %arg6[%c0_11, %c0_12], %12 {strides = array<i32>} : memref<8x784xf32, #tpu.memory_space<vmem>>, vector<8x784xf32>,
    %c0_13 = arith.constant 0 : index
    %c0_14 = arith.constant 0 : index
    %14 = vector.load %arg7[%c0_13, %c0_14] : memref<8x32xf32, #tpu.memory_space<vmem>>, vector<8x32xf32>
    tpu.vector_store %arg7[%c0_13, %c0_14], %7 {strides = array<i32>} : memref<8x32xf32, #tpu.memory_space<vmem>>, vector<8x32xf32>,
    return
  }
  func.func @transform_0(%arg0: i32) -> (i32, i32) {
    %c0_i32 = arith.constant 0 : i32
    %c0_i32_0 = arith.constant 0 : i32
    return %arg0, %c0_i32 : i32, i32
  }
  func.func @transform_1(%arg0: i32) -> (i32, i32) {
    %c0_i32 = arith.constant 0 : i32
    %c0_i32_0 = arith.constant 0 : i32
    %c0_i32_1 = arith.constant 0 : i32
    return %c0_i32, %c0_i32_0 : i32, i32
  }
  func.func @transform_2(%arg0: i32) -> (i32, i32) {
    %c0_i32 = arith.constant 0 : i32
    %c0_i32_0 = arith.constant 0 : i32
    %c0_i32_1 = arith.constant 0 : i32
    return %c0_i32, %c0_i32_0 : i32, i32
  }
  func.func @transform_3(%arg0: i32) -> (i32, i32) {
    %c0_i32 = arith.constant 0 : i32
    %c0_i32_0 = arith.constant 0 : i32
    %c0_i32_1 = arith.constant 0 : i32
    return %c0_i32, %c0_i32_0 : i32, i32
  }
  func.func @transform_4(%arg0: i32) -> (i32, i32) {
    %c0_i32 = arith.constant 0 : i32
    %c0_i32_0 = arith.constant 0 : i32
    %c0_i32_1 = arith.constant 0 : i32
    return %c0_i32, %c0_i32_0 : i32, i32
  }
  func.func @transform_5(%arg0: i32) -> (i32, i32) {
    %c0_i32 = arith.constant 0 : i32
    %c0_i32_0 = arith.constant 0 : i32
    return %arg0, %c0_i32 : i32, i32
  }
  func.func @transform_6(%arg0: i32) -> (i32, i32) {
    %c0_i32 = arith.constant 0 : i32
    %c0_i32_0 = arith.constant 0 : i32
    return %arg0, %c0_i32 : i32, i32
  }
}

</mosaic_0001>

<llo_original>
// kernel: autoencoder_forward.1
$region0: #{autoencoder_forward.1}
  #allocation0 [shape = 'u32[]', space=smem, size = 0x4, offset = 0x4, fixed_abs, tag = 'smem constant byte address 0x4 - core index']
  #allocation1 [shape = 'u32[72,128]{1,0:T(1,128)}', space=vmem, size = 0x9000, scoped, tag = 'internal scratch']
  %s0 = inlined_call_operand.vmem [shape: f32[8,784], index: 0, kind: input, shape index: {}]
  %s1 = inlined_call_operand.vmem [shape: f32[784,32], index: 1, kind: input, shape index: {}]
  %s2 = inlined_call_operand.vmem [shape: f32[1,32], index: 2, kind: input, shape index: {}]
  %s3 = inlined_call_operand.vmem [shape: f32[32,784], index: 3, kind: input, shape index: {}]
  %s4 = inlined_call_operand.vmem [shape: f32[1,784], index: 4, kind: input, shape index: {}]
  %s5 = inlined_call_operand.hbm [shape: f32[8,784], index: 5, kind: output, shape index: {0}]
  %s6 = inlined_call_operand.hbm [shape: f32[8,32], index: 6, kind: output, shape index: {1}]
  %7 = xla_tuple %s5, %s6
  %s8 = sld [smem:[#allocation0]]
  $region38: #{autoencoder_forward.1} parent=0
    _
  %s10 = ssub.s32 1, %s8
  %s11 = scalar_select 0, %s10, %s8
  $region1: #{autoencoder_forward.1} parent=0
    #allocation2 [shape = 'u8[28672]{0}', space=vmem, size = 0x7000, scoped, tag = 'output window, operand 0, single buffered']
    #allocation3 [shape = 's32[1]{0}', space=sflag, size = 0x4, scoped, tag = 'scoped memory for autoencoder_forward.1']
    #allocation4 [shape = 'u8[4096]{0}', space=vmem, size = 0x1000, scoped, tag = 'output window, operand 1, single buffered']
    #allocation5 [shape = 's32[1]{0}', space=sflag, size = 0x4, scoped, tag = 'scoped memory for autoencoder_forward.1']
    %12 = vsyncpa [#allocation3], 0
    %13 = vsyncpa [#allocation5], 0
    // Predicated region
    $region2: #{autoencoder_forward.1} parent=1 // pred_check
      _
    $region3: #{autoencoder_forward.1} parent=1 // pred_check_branch
      %15 = sbr.rel (0) target = $region5
    $region4: #{autoencoder_forward.1} parent=1 // pred_region
      _
    $region5: #{autoencoder_forward.1} parent=1 // pred_fallthru
      _
    // Predicated region
    $region6: #{autoencoder_forward.1} parent=1 // pred_check
      _
    $region7: #{autoencoder_forward.1} parent=1 // pred_check_branch
      %17 = sbr.rel (0) target = $region9
    $region8: #{autoencoder_forward.1} parent=1 // pred_region
      _
    $region9: #{autoencoder_forward.1} parent=1 // pred_fallthru
      _
    // Predicated region
    $region10: #{autoencoder_forward.1} parent=1 // pred_check
      _
    $region11: #{autoencoder_forward.1} parent=1 // pred_check_branch
      %19 = sbr.rel (0) target = $region13
    $region12: #{autoencoder_forward.1} parent=1 // pred_region
      _
    $region13: #{autoencoder_forward.1} parent=1 // pred_fallthru
      _
    // Predicated region
    $region14: #{autoencoder_forward.1} parent=1 // pred_check
      _
    $region15: #{autoencoder_forward.1} parent=1 // pred_check_branch
      %21 = sbr.rel (0) target = $region17
    $region16: #{autoencoder_forward.1} parent=1 // pred_region
      _
    $region17: #{autoencoder_forward.1} parent=1 // pred_fallthru
      _
    // Predicated region
    $region18: #{autoencoder_forward.1} parent=1 // pred_check
      _
    $region19: #{autoencoder_forward.1} parent=1 // pred_check_branch
      %23 = sbr.rel (0) target = $region21
    $region20: #{autoencoder_forward.1} parent=1 // pred_region
      _
    $region21: #{autoencoder_forward.1} parent=1 // pred_fallthru
      _
    %v24 = vld [vmem:[%s0] sm:$0xff]
    %v25 = vld [vmem:[%s0 + $0x8] sm:$0xff]
    %v26 = vld [vmem:[%s0 + $0x10] sm:$0xff]
    %v27 = vld [vmem:[%s0 + $0x18] sm:$0xff]
    %v28 = vld [vmem:[%s0 + $0x20] sm:$0xff]
    %v29 = vld [vmem:[%s0 + $0x28] sm:$0xff]
    %v30 = vld [vmem:[%s0 + $0x30] sm:$0xff]
    %v31 = vld [vmem:[%s1] sm:$0xff]
    %v32 = vld [vmem:[%s1 + $0x8] sm:$0xff]
    %v33 = vld [vmem:[%s1 + $0x10] sm:$0xff]
    %v34 = vld [vmem:[%s1 + $0x18] sm:$0xff]
    %v35 = vld [vmem:[%s1 + $0x20] sm:$0xff]
    %v36 = vld [vmem:[%s1 + $0x28] sm:$0xff]
    %v37 = vld [vmem:[%s1 + $0x30] sm:$0xff]
    %v38 = vld [vmem:[%s1 + $0x38] sm:$0xff]
    %v39 = vld [vmem:[%s1 + $0x40] sm:$0xff]
    %v40 = vld [vmem:[%s1 + $0x48] sm:$0xff]
    %v41 = vld [vmem:[%s1 + $0x50] sm:$0xff]
    %v42 = vld [vmem:[%s1 + $0x58] sm:$0xff]
    %v43 = vld [vmem:[%s1 + $0x60] sm:$0xff]
    %v44 = vld [vmem:[%s1 + $0x68] sm:$0xff]
    %v45 = vld [vmem:[%s1 + $0x70] sm:$0xff]
    %v46 = vld [vmem:[%s1 + $0x78] sm:$0xff]
    %v47 = vld [vmem:[%s1 + $0x80] sm:$0xff]
    %v48 = vld [vmem:[%s1 + $0x88] sm:$0xff]
    %v49 = vld [vmem:[%s1 + $0x90] sm:$0xff]
    %v50 = vld [vmem:[%s1 + $0x98] sm:$0xff]
    %v51 = vld [vmem:[%s1 + $0xa0] sm:$0xff]
    %v52 = vld [vmem:[%s1 + $0xa8] sm:$0xff]
    %v53 = vld [vmem:[%s1 + $0xb0] sm:$0xff]
    %v54 = vld [vmem:[%s1 + $0xb8] sm:$0xff]
    %v55 = vld [vmem:[%s1 + $0xc0] sm:$0xff]
    %v56 = vld [vmem:[%s1 + $0xc8] sm:$0xff]
    %v57 = vld [vmem:[%s1 + $0xd0] sm:$0xff]
    %v58 = vld [vmem:[%s1 + $0xd8] sm:$0xff]
    %v59 = vld [vmem:[%s1 + $0xe0] sm:$0xff]
    %v60 = vld [vmem:[%s1 + $0xe8] sm:$0xff]
    %v61 = vld [vmem:[%s1 + $0xf0] sm:$0xff]
    %v62 = vld [vmem:[%s1 + $0xf8] sm:$0xff]
    %v63 = vld [vmem:[%s1 + $0x100] sm:$0xff]
    %v64 = vld [vmem:[%s1 + $0x108] sm:$0xff]
    %v65 = vld [vmem:[%s1 + $0x110] sm:$0xff]
    %v66 = vld [vmem:[%s1 + $0x118] sm:$0xff]
    %v67 = vld [vmem:[%s1 + $0x120] sm:$0xff]
    %v68 = vld [vmem:[%s1 + $0x128] sm:$0xff]
    %v69 = vld [vmem:[%s1 + $0x130] sm:$0xff]
    %v70 = vld [vmem:[%s1 + $0x138] sm:$0xff]
    %v71 = vld [vmem:[%s1 + $0x140] sm:$0xff]
    %v72 = vld [vmem:[%s1 + $0x148] sm:$0xff]
    %v73 = vld [vmem:[%s1 + $0x150] sm:$0xff]
    %v74 = vld [vmem:[%s1 + $0x158] sm:$0xff]
    %v75 = vld [vmem:[%s1 + $0x160] sm:$0xff]
    %v76 = vld [vmem:[%s1 + $0x168] sm:$0xff]
    %v77 = vld [vmem:[%s1 + $0x170] sm:$0xff]
    %v78 = vld [vmem:[%s1 + $0x178] sm:$0xff]
    %v79 = vld [vmem:[%s1 + $0x180] sm:$0xff]
    %v80 = vld [vmem:[%s1 + $0x188] sm:$0xff]
    %v81 = vld [vmem:[%s1 + $0x190] sm:$0xff]
    %v82 = vld [vmem:[%s1 + $0x198] sm:$0xff]
    %v83 = vld [vmem:[%s1 + $0x1a0] sm:$0xff]
    %v84 = vld [vmem:[%s1 + $0x1a8] sm:$0xff]
    %v85 = vld [vmem:[%s1 + $0x1b0] sm:$0xff]
    %v86 = vld [vmem:[%s1 + $0x1b8] sm:$0xff]
    %v87 = vld [vmem:[%s1 + $0x1c0] sm:$0xff]
    %v88 = vld [vmem:[%s1 + $0x1c8] sm:$0xff]
    %v89 = vld [vmem:[%s1 + $0x1d0] sm:$0xff]
    %v90 = vld [vmem:[%s1 + $0x1d8] sm:$0xff]
    %v91 = vld [vmem:[%s1 + $0x1e0] sm:$0xff]
    %v92 = vld [vmem:[%s1 + $0x1e8] sm:$0xff]
    %v93 = vld [vmem:[%s1 + $0x1f0] sm:$0xff]
    %v94 = vld [vmem:[%s1 + $0x1f8] sm:$0xff]
    %v95 = vld [vmem:[%s1 + $0x200] sm:$0xff]
    %v96 = vld [vmem:[%s1 + $0x208] sm:$0xff]
    %v97 = vld [vmem:[%s1 + $0x210] sm:$0xff]
    %v98 = vld [vmem:[%s1 + $0x218] sm:$0xff]
    %v99 = vld [vmem:[%s1 + $0x220] sm:$0xff]
    %v100 = vld [vmem:[%s1 + $0x228] sm:$0xff]
    %v101 = vld [vmem:[%s1 + $0x230] sm:$0xff]
    %v102 = vld [vmem:[%s1 + $0x238] sm:$0xff]
    %v103 = vld [vmem:[%s1 + $0x240] sm:$0xff]
    %v104 = vld [vmem:[%s1 + $0x248] sm:$0xff]
    %v105 = vld [vmem:[%s1 + $0x250] sm:$0xff]
    %v106 = vld [vmem:[%s1 + $0x258] sm:$0xff]
    %v107 = vld [vmem:[%s1 + $0x260] sm:$0xff]
    %v108 = vld [vmem:[%s1 + $0x268] sm:$0xff]
    %v109 = vld [vmem:[%s1 + $0x270] sm:$0xff]
    %v110 = vld [vmem:[%s1 + $0x278] sm:$0xff]
    %v111 = vld [vmem:[%s1 + $0x280] sm:$0xff]
    %v112 = vld [vmem:[%s1 + $0x288] sm:$0xff]
    %v113 = vld [vmem:[%s1 + $0x290] sm:$0xff]
    %v114 = vld [vmem:[%s1 + $0x298] sm:$0xff]
    %v115 = vld [vmem:[%s1 + $0x2a0] sm:$0xff]
    %v116 = vld [vmem:[%s1 + $0x2a8] sm:$0xff]
    %v117 = vld [vmem:[%s1 + $0x2b0] sm:$0xff]
    %v118 = vld [vmem:[%s1 + $0x2b8] sm:$0xff]
    %v119 = vld [vmem:[%s1 + $0x2c0] sm:$0xff]
    %v120 = vld [vmem:[%s1 + $0x2c8] sm:$0xff]
    %v121 = vld [vmem:[%s1 + $0x2d0] sm:$0xff]
    %v122 = vld [vmem:[%s1 + $0x2d8] sm:$0xff]
    %v123 = vld [vmem:[%s1 + $0x2e0] sm:$0xff]
    %v124 = vld [vmem:[%s1 + $0x2e8] sm:$0xff]
    %v125 = vld [vmem:[%s1 + $0x2f0] sm:$0xff]
    %v126 = vld [vmem:[%s1 + $0x2f8] sm:$0xff]
    %v127 = vld [vmem:[%s1 + $0x300] sm:$0xff]
    %v128 = vld [vmem:[%s1 + $0x308] sm:$0xff]
    %v129 = vld [vmem:[%s2] sm:$0x1]
    %v131 = vperm.slane %v129, 0
    %vm133 = vcmask 130048
    %v135 = vsel %vm133, %v30, 0
    %137 = vmatpush.msra.mxu0 %v46
    %138 = vmatpush.msra.mxu0 %v45
    %139 = vmatpush.msra.mxu0 %v44
    %140 = vmatpush.msra.mxu0 %v43
    %141 = vmatpush.msra.mxu0 %v42
    %142 = vmatpush.msra.mxu0 %v41
    %143 = vmatpush.msra.mxu0 %v40
    %144 = vmatpush.msra.mxu0 %v39
    %145 = vmatpush.msra.mxu0 %v38
    %146 = vmatpush.msra.mxu0 %v37
    %147 = vmatpush.msra.mxu0 %v36
    %148 = vmatpush.msra.mxu0 %v35
    %149 = vmatpush.msra.mxu0 %v34
    %150 = vmatpush.msra.mxu0 %v33
    %151 = vmatpush.msra.mxu0 %v32
    %152 = vmatpush.msra.mxu0 %v31
    %153 = vmatmul.f32.gmra.mxu0 %v24
    %v154 = vpop.f32.mrf.mxu0
    %v155 = vadd.f32 %v131, %v154
    %156 = vdwg.mxu0
    %157 = vmatpush.msra.mxu0 %v62
    %158 = vmatpush.msra.mxu0 %v61
    %159 = vmatpush.msra.mxu0 %v60
    %160 = vmatpush.msra.mxu0 %v59
    %161 = vmatpush.msra.mxu0 %v58
    %162 = vmatpush.msra.mxu0 %v57
    %163 = vmatpush.msra.mxu0 %v56
    %164 = vmatpush.msra.mxu0 %v55
    %165 = vmatpush.msra.mxu0 %v54
    %166 = vmatpush.msra.mxu0 %v53
    %167 = vmatpush.msra.mxu0 %v52
    %168 = vmatpush.msra.mxu0 %v51
    %169 = vmatpush.msra.mxu0 %v50
    %170 = vmatpush.msra.mxu0 %v49
    %171 = vmatpush.msra.mxu0 %v48
    %172 = vmatpush.msra.mxu0 %v47
    %173 = vmatmul.f32.gmra.mxu0 %v25
    %v174 = vpop.f32.mrf.mxu0
    %v175 = vadd.f32 %v155, %v174
    %176 = vdwg.mxu0
    %177 = vmatpush.msra.mxu0 %v78
    %178 = vmatpush.msra.mxu0 %v77
    %179 = vmatpush.msra.mxu0 %v76
    %180 = vmatpush.msra.mxu0 %v75
    %181 = vmatpush.msra.mxu0 %v74
    %182 = vmatpush.msra.mxu0 %v73
    %183 = vmatpush.msra.mxu0 %v72
    %184 = vmatpush.msra.mxu0 %v71
    %185 = vmatpush.msra.mxu0 %v70
    %186 = vmatpush.msra.mxu0 %v69
    %187 = vmatpush.msra.mxu0 %v68
    %188 = vmatpush.msra.mxu0 %v67
    %189 = vmatpush.msra.mxu0 %v66
    %190 = vmatpush.msra.mxu0 %v65
    %191 = vmatpush.msra.mxu0 %v64
    %192 = vmatpush.msra.mxu0 %v63
    %193 = vmatmul.f32.gmra.mxu0 %v26
    %v194 = vpop.f32.mrf.mxu0
    %v195 = vadd.f32 %v175, %v194
    %196 = vdwg.mxu0
    %197 = vmatpush.msra.mxu0 %v94
    %198 = vmatpush.msra.mxu0 %v93
    %199 = vmatpush.msra.mxu0 %v92
    %200 = vmatpush.msra.mxu0 %v91
    %201 = vmatpush.msra.mxu0 %v90
    %202 = vmatpush.msra.mxu0 %v89
    %203 = vmatpush.msra.mxu0 %v88
    %204 = vmatpush.msra.mxu0 %v87
    %205 = vmatpush.msra.mxu0 %v86
    %206 = vmatpush.msra.mxu0 %v85
    %207 = vmatpush.msra.mxu0 %v84
    %208 = vmatpush.msra.mxu0 %v83
    %209 = vmatpush.msra.mxu0 %v82
    %210 = vmatpush.msra.mxu0 %v81
    %211 = vmatpush.msra.mxu0 %v80
    %212 = vmatpush.msra.mxu0 %v79
    %213 = vmatmul.f32.gmra.mxu0 %v27
    %v214 = vpop.f32.mrf.mxu0
    %v215 = vadd.f32 %v195, %v214
    %216 = vdwg.mxu0
    %217 = vmatpush.msra.mxu0 %v110
    %218 = vmatpush.msra.mxu0 %v109
    %219 = vmatpush.msra.mxu0 %v108
    %220 = vmatpush.msra.mxu0 %v107
    %221 = vmatpush.msra.mxu0 %v106
    %222 = vmatpush.msra.mxu0 %v105
    %223 = vmatpush.msra.mxu0 %v104
    %224 = vmatpush.msra.mxu0 %v103
    %225 = vmatpush.msra.mxu0 %v102
    %226 = vmatpush.msra.mxu0 %v101
    %227 = vmatpush.msra.mxu0 %v100
    %228 = vmatpush.msra.mxu0 %v99
    %229 = vmatpush.msra.mxu0 %v98
    %230 = vmatpush.msra.mxu0 %v97
    %231 = vmatpush.msra.mxu0 %v96
    %232 = vmatpush.msra.mxu0 %v95
    %233 = vmatmul.f32.gmra.mxu0 %v28
    %v234 = vpop.f32.mrf.mxu0
    %v235 = vadd.f32 %v215, %v234
    %236 = vdwg.mxu0
    %237 = vmatpush.msra.mxu0 %v126
    %238 = vmatpush.msra.mxu0 %v125
    %239 = vmatpush.msra.mxu0 %v124
    %240 = vmatpush.msra.mxu0 %v123
    %241 = vmatpush.msra.mxu0 %v122
    %242 = vmatpush.msra.mxu0 %v121
    %243 = vmatpush.msra.mxu0 %v120
    %244 = vmatpush.msra.mxu0 %v119
    %245 = vmatpush.msra.mxu0 %v118
    %246 = vmatpush.msra.mxu0 %v117
    %247 = vmatpush.msra.mxu0 %v116
    %248 = vmatpush.msra.mxu0 %v115
    %249 = vmatpush.msra.mxu0 %v114
    %250 = vmatpush.msra.mxu0 %v113
    %251 = vmatpush.msra.mxu0 %v112
    %252 = vmatpush.msra.mxu0 %v111
    %253 = vmatmul.f32.gmra.mxu0 %v29
    %v254 = vpop.f32.mrf.mxu0
    %v255 = vadd.f32 %v235, %v254
    %256 = vdwg.mxu0
    %257 = vmatpush.msra.mxu0 0.0
    %258 = vmatpush.msra.mxu0 0.0
    %259 = vmatpush.msra.mxu0 0.0
    %260 = vmatpush.msra.mxu0 0.0
    %261 = vmatpush.msra.mxu0 0.0
    %262 = vmatpush.msra.mxu0 0.0
    %263 = vmatpush.msra.mxu0 0.0
    %264 = vmatpush.msra.mxu0 0.0
    %265 = vmatpush.msra.mxu0 0.0
    %266 = vmatpush.msra.mxu0 0.0
    %267 = vmatpush.msra.mxu0 0.0
    %268 = vmatpush.msra.mxu0 0.0
    %269 = vmatpush.msra.mxu0 0.0
    %270 = vmatpush.msra.mxu0 0.0
    %271 = vmatpush.msra.mxu0 %v128
    %272 = vmatpush.msra.mxu0 %v127
    %273 = vmatmul.f32.gmra.mxu0 %v135
    %v274 = vpop.f32.mrf.mxu0
    %v275 = vadd.f32 %v255, %v274
    %276 = vdwg.mxu0
    %v277 = vmax.f32 %v275, 0.0
    %v278 = vld [vmem:[%s3] sm:$0xff]
    %v279 = vld [vmem:[%s3 + $0x8] sm:$0xff]
    %v280 = vld [vmem:[%s3 + $0x10] sm:$0xff]
    %v281 = vld [vmem:[%s3 + $0x18] sm:$0xff]
    %v282 = vld [vmem:[%s3 + $0x20] sm:$0xff]
    %v283 = vld [vmem:[%s3 + $0x28] sm:$0xff]
    %v284 = vld [vmem:[%s3 + $0x30] sm:$0xff]
    %v285 = vld [vmem:[%s3 + $0x38] sm:$0xff]
    %v286 = vld [vmem:[%s3 + $0x40] sm:$0xff]
    %v287 = vld [vmem:[%s3 + $0x48] sm:$0xff]
    %v288 = vld [vmem:[%s3 + $0x50] sm:$0xff]
    %v289 = vld [vmem:[%s3 + $0x58] sm:$0xff]
    %v290 = vld [vmem:[%s3 + $0x60] sm:$0xff]
    %v291 = vld [vmem:[%s3 + $0x68] sm:$0xff]
    %v292 = vld [vmem:[%s3 + $0x70] sm:$0xff]
    %v293 = vld [vmem:[%s3 + $0x78] sm:$0xff]
    %v294 = vld [vmem:[%s3 + $0x80] sm:$0xff]
    %v295 = vld [vmem:[%s3 + $0x88] sm:$0xff]
    %v296 = vld [vmem:[%s3 + $0x90] sm:$0xff]
    %v297 = vld [vmem:[%s3 + $0x98] sm:$0xff]
    %v298 = vld [vmem:[%s3 + $0xa0] sm:$0xff]
    %v299 = vld [vmem:[%s3 + $0xa8] sm:$0xff]
    %v300 = vld [vmem:[%s3 + $0xb0] sm:$0xff]
    %v301 = vld [vmem:[%s3 + $0xb8] sm:$0xff]
    %v302 = vld [vmem:[%s3 + $0xc0] sm:$0xff]
    %v303 = vld [vmem:[%s3 + $0xc8] sm:$0xff]
    %v304 = vld [vmem:[%s3 + $0xd0] sm:$0xff]
    %v305 = vld [vmem:[%s3 + $0xd8] sm:$0xff]
    %v306 = vld [vmem:[%s4] sm:$0x7f]
    %v308 = vperm.slane %v306, 0
    %v309 = vperm.slane %v306, 1
    %v310 = vperm.slane %v306, 2
    %v311 = vperm.slane %v306, 3
    %v312 = vperm.slane %v306, 4
    %v313 = vperm.slane %v306, 5
    %v314 = vperm.slane %v306, 6
    %vm322 = vcmask 261120
    %v324 = vsel %vm322, %v277, 0
    %326 = vmatpush.msra.mxu0 0.0
    %327 = vmatpush.msra.mxu0 0.0
    %328 = vmatpush.msra.mxu0 0.0
    %329 = vmatpush.msra.mxu0 0.0
    %330 = vmatpush.msra.mxu0 0.0
    %331 = vmatpush.msra.mxu0 0.0
    %332 = vmatpush.msra.mxu0 0.0
    %333 = vmatpush.msra.mxu0 0.0
    %334 = vmatpush.msra.mxu0 0.0
    %335 = vmatpush.msra.mxu0 0.0
    %336 = vmatpush.msra.mxu0 0.0
    %337 = vmatpush.msra.mxu0 0.0
    %338 = vmatpush.msra.mxu0 %v299
    %339 = vmatpush.msra.mxu0 %v292
    %340 = vmatpush.msra.mxu0 %v285
    %341 = vmatpush.msra.mxu0 %v278
    %342 = vmatmul.f32.gmra.mxu0 %v324
    %v343 = vpop.f32.mrf.mxu0
    %v344 = vadd.f32 %v308, %v343
    %345 = vdwg.mxu0
    %346 = vmatpush.msra.mxu0 0.0
    %347 = vmatpush.msra.mxu0 0.0
    %348 = vmatpush.msra.mxu0 0.0
    %349 = vmatpush.msra.mxu0 0.0
    %350 = vmatpush.msra.mxu0 0.0
    %351 = vmatpush.msra.mxu0 0.0
    %352 = vmatpush.msra.mxu0 0.0
    %353 = vmatpush.msra.mxu0 0.0
    %354 = vmatpush.msra.mxu0 0.0
    %355 = vmatpush.msra.mxu0 0.0
    %356 = vmatpush.msra.mxu0 0.0
    %357 = vmatpush.msra.mxu0 0.0
    %358 = vmatpush.msra.mxu0 %v300
    %359 = vmatpush.msra.mxu0 %v293
    %360 = vmatpush.msra.mxu0 %v286
    %361 = vmatpush.msra.mxu0 %v279
    %362 = vmatmul.f32.gmra.mxu0 %v324
    %v363 = vpop.f32.mrf.mxu0
    %v364 = vadd.f32 %v309, %v363
    %365 = vdwg.mxu0
    %366 = vmatpush.msra.mxu0 0.0
    %367 = vmatpush.msra.mxu0 0.0
    %368 = vmatpush.msra.mxu0 0.0
    %369 = vmatpush.msra.mxu0 0.0
    %370 = vmatpush.msra.mxu0 0.0
    %371 = vmatpush.msra.mxu0 0.0
    %372 = vmatpush.msra.mxu0 0.0
    %373 = vmatpush.msra.mxu0 0.0
    %374 = vmatpush.msra.mxu0 0.0
    %375 = vmatpush.msra.mxu0 0.0
    %376 = vmatpush.msra.mxu0 0.0
    %377 = vmatpush.msra.mxu0 0.0
    %378 = vmatpush.msra.mxu0 %v301
    %379 = vmatpush.msra.mxu0 %v294
    %380 = vmatpush.msra.mxu0 %v287
    %381 = vmatpush.msra.mxu0 %v280
    %382 = vmatmul.f32.gmra.mxu0 %v324
    %v383 = vpop.f32.mrf.mxu0
    %v384 = vadd.f32 %v310, %v383
    %385 = vdwg.mxu0
    %386 = vmatpush.msra.mxu0 0.0
    %387 = vmatpush.msra.mxu0 0.0
    %388 = vmatpush.msra.mxu0 0.0
    %389 = vmatpush.msra.mxu0 0.0
    %390 = vmatpush.msra.mxu0 0.0
    %391 = vmatpush.msra.mxu0 0.0
    %392 = vmatpush.msra.mxu0 0.0
    %393 = vmatpush.msra.mxu0 0.0
    %394 = vmatpush.msra.mxu0 0.0
    %395 = vmatpush.msra.mxu0 0.0
    %396 = vmatpush.msra.mxu0 0.0
    %397 = vmatpush.msra.mxu0 0.0
    %398 = vmatpush.msra.mxu0 %v302
    %399 = vmatpush.msra.mxu0 %v295
    %400 = vmatpush.msra.mxu0 %v288
    %401 = vmatpush.msra.mxu0 %v281
    %402 = vmatmul.f32.gmra.mxu0 %v324
    %v403 = vpop.f32.mrf.mxu0
    %v404 = vadd.f32 %v311, %v403
    %405 = vdwg.mxu0
    %406 = vmatpush.msra.mxu0 0.0
    %407 = vmatpush.msra.mxu0 0.0
    %408 = vmatpush.msra.mxu0 0.0
    %409 = vmatpush.msra.mxu0 0.0
    %410 = vmatpush.msra.mxu0 0.0
    %411 = vmatpush.msra.mxu0 0.0
    %412 = vmatpush.msra.mxu0 0.0
    %413 = vmatpush.msra.mxu0 0.0
    %414 = vmatpush.msra.mxu0 0.0
    %415 = vmatpush.msra.mxu0 0.0
    %416 = vmatpush.msra.mxu0 0.0
    %417 = vmatpush.msra.mxu0 0.0
    %418 = vmatpush.msra.mxu0 %v303
    %419 = vmatpush.msra.mxu0 %v296
    %420 = vmatpush.msra.mxu0 %v289
    %421 = vmatpush.msra.mxu0 %v282
    %422 = vmatmul.f32.gmra.mxu0 %v324
    %v423 = vpop.f32.mrf.mxu0
    %v424 = vadd.f32 %v312, %v423
    %425 = vdwg.mxu0
    %426 = vmatpush.msra.mxu0 0.0
    %427 = vmatpush.msra.mxu0 0.0
    %428 = vmatpush.msra.mxu0 0.0
    %429 = vmatpush.msra.mxu0 0.0
    %430 = vmatpush.msra.mxu0 0.0
    %431 = vmatpush.msra.mxu0 0.0
    %432 = vmatpush.msra.mxu0 0.0
    %433 = vmatpush.msra.mxu0 0.0
    %434 = vmatpush.msra.mxu0 0.0
    %435 = vmatpush.msra.mxu0 0.0
    %436 = vmatpush.msra.mxu0 0.0
    %437 = vmatpush.msra.mxu0 0.0
    %438 = vmatpush.msra.mxu0 %v304
    %439 = vmatpush.msra.mxu0 %v297
    %440 = vmatpush.msra.mxu0 %v290
    %441 = vmatpush.msra.mxu0 %v283
    %442 = vmatmul.f32.gmra.mxu0 %v324
    %v443 = vpop.f32.mrf.mxu0
    %v444 = vadd.f32 %v313, %v443
    %445 = vdwg.mxu0
    %446 = vmatpush.msra.mxu0 0.0
    %447 = vmatpush.msra.mxu0 0.0
    %448 = vmatpush.msra.mxu0 0.0
    %449 = vmatpush.msra.mxu0 0.0
    %450 = vmatpush.msra.mxu0 0.0
    %451 = vmatpush.msra.mxu0 0.0
    %452 = vmatpush.msra.mxu0 0.0
    %453 = vmatpush.msra.mxu0 0.0
    %454 = vmatpush.msra.mxu0 0.0
    %455 = vmatpush.msra.mxu0 0.0
    %456 = vmatpush.msra.mxu0 0.0
    %457 = vmatpush.msra.mxu0 0.0
    %458 = vmatpush.msra.mxu0 %v305
    %459 = vmatpush.msra.mxu0 %v298
    %460 = vmatpush.msra.mxu0 %v291
    %461 = vmatpush.msra.mxu0 %v284
    %462 = vmatmul.f32.gmra.mxu0 %v324
    %v463 = vpop.f32.mrf.mxu0
    %v464 = vadd.f32 %v314, %v463
    %465 = vdwg.mxu0
    %466 = vst [vmem:[#allocation2] sm:$0xff] %v344
    %467 = vst [vmem:[#allocation2 + $0x8] sm:$0xff] %v364
    %468 = vst [vmem:[#allocation2 + $0x10] sm:$0xff] %v384
    %469 = vst [vmem:[#allocation2 + $0x18] sm:$0xff] %v404
    %470 = vst [vmem:[#allocation2 + $0x20] sm:$0xff] %v424
    %471 = vst [vmem:[#allocation2 + $0x28] sm:$0xff] %v444
    %472 = vst.msk [vmem:[#allocation2 + $0x30] sm:$0xff] %vm133, %v464
    %473 = vst.msk [vmem:[#allocation4] sm:$0xff] %vm322, %v277
    // Predicated region
    $region22: #{autoencoder_forward.1} parent=1 // pred_check
      _
    $region23: #{autoencoder_forward.1} parent=1 // pred_check_branch
      %475 = sbr.rel (0) target = $region25
    $region24: #{autoencoder_forward.1} parent=1 // pred_region
      %477 = vsyncadd [#allocation3], 0
      %s479 = sshll.u32 [#allocation2], 4
      %s480 = int_to_ptr.vmem [resolvable:$true] %s479
      %s481 = sshll.u32 %s5, 4
      %s482 = int_to_ptr.hbm [resolvable:$true] %s481
      %484 = dma.vmem_to_hbm [thread:$0]  %s480, 896, %s482, [#allocation3]
    $region25: #{autoencoder_forward.1} parent=1 // pred_fallthru
      _
    // Predicated region
    $region26: #{autoencoder_forward.1} parent=1 // pred_check
      _
    $region27: #{autoencoder_forward.1} parent=1 // pred_check_branch
      %486 = sbr.rel (0) target = $region29
    $region28: #{autoencoder_forward.1} parent=1 // pred_region
      %488 = vsyncadd [#allocation5], 0
      %s490 = sshll.u32 [#allocation4], 4
      %s491 = int_to_ptr.vmem [resolvable:$true] %s490
      %s492 = sshll.u32 %s6, 4
      %s493 = int_to_ptr.hbm [resolvable:$true] %s492
      %495 = dma.vmem_to_hbm [thread:$0]  %s491, 128, %s493, [#allocation5]
    $region29: #{autoencoder_forward.1} parent=1 // pred_fallthru
      _
    // Predicated region
    $region30: #{autoencoder_forward.1} parent=1 // pred_check
      _
    $region31: #{autoencoder_forward.1} parent=1 // pred_check_branch
      %497 = sbr.rel (0) target = $region33
    $region32: #{autoencoder_forward.1} parent=1 // pred_region
      %499 = dma.done [#allocation3], 896
    $region33: #{autoencoder_forward.1} parent=1 // pred_fallthru
      _
    // Predicated region
    $region34: #{autoencoder_forward.1} parent=1 // pred_check
      _
    $region35: #{autoencoder_forward.1} parent=1 // pred_check_branch
      %501 = sbr.rel (0) target = $region37
    $region36: #{autoencoder_forward.1} parent=1 // pred_region
      %503 = dma.done [#allocation5], 128
    $region37: #{autoencoder_forward.1} parent=1 // pred_fallthru
      _
    %504 = vsyncpa [#allocation3], 1
    %505 = vsyncpa [#allocation5], 1

</llo_original>
